<compile_context>
chip_gen: v7x
topology: tpu7x:2x2x1
jax: 0.10.0
libtpu: 0.0.40
codegen_flags: <defaults>
</compile_context>

<pallas_src>
import jax
import jax.numpy as jnp
from jax import lax
from jax.experimental import pallas as pl
from jax.experimental.pallas import tpu as pltpu


def _round_up(a, b):
    return -(-a // b) * b


def _round_down(a, b):
    return (a // b) * b


def _min_value(dtype):
    dtype = jnp.dtype(dtype)
    if jnp.issubdtype(dtype, jnp.floating):
        return float("-inf")
    return int(jnp.iinfo(dtype).min)


def _sublane_multiple(dtype):
    # (8,128) native tile for 32-bit; sub-32-bit dtypes pack along sublanes.
    return max(8, 32 // jnp.dtype(dtype).itemsize)


# Per-input-buffer VMEM budget. The pipeline double-buffers the input, so the
# resident input footprint is ~2x this; with the tiny output / scratch it stays
# comfortably under the scoped VMEM ceiling on every generation (incl. v7x).
_TILE_BUDGET_BYTES = 4 * 1024 * 1024


def _choose_tiles(rows, cols, itemsize, sub):
    cols_pad = _round_up(cols, 128)
    # Lane-dim tile: as many columns as fit in the budget at `sub` rows,
    # but never wider than the (lane-padded) reduction width.
    tc = max(128, _round_down(_TILE_BUDGET_BYTES // (sub * itemsize), 128))
    tc = min(tc, cols_pad)
    # Sublane-dim tile fills the remaining budget.
    tr = max(sub, _round_down(_TILE_BUDGET_BYTES // (tc * itemsize), sub))
    tr = min(tr, _round_up(rows, sub))
    # Keep >=2 row tiles when rows allow, so the "parallel" axis can be
    # sharded across the 2 TensorCores on v7x.
    if rows > sub:
        tr = min(tr, _round_up(-(-rows // 2), sub))
    return max(tr, sub), tc


def _make_kernel(rows, cols, tr, tc, fill, mask_rows, mask_cols):
    def kernel(x_ref, o_ref, acc_ref):
        k = pl.program_id(1)

        @pl.when(k == 0)
        def _init():
            acc_ref[...] = jnp.full(acc_ref.shape, fill, dtype=acc_ref.dtype)

        x = x_ref[...]
        if mask_rows or mask_cols:
            valid = None
            if mask_rows:
                row_ids = (pl.program_id(0) * tr
                           + lax.broadcasted_iota(jnp.int32, (tr, 1), 0))
                valid = row_ids < rows
            if mask_cols:
                col_ids = k * tc + lax.broadcasted_iota(jnp.int32, (1, tc), 1)
                col_ok = col_ids < cols
                valid = col_ok if valid is None else (valid & col_ok)
            x = jnp.where(valid, x, jnp.asarray(fill, dtype=x.dtype))

        acc_ref[...] = jnp.maximum(acc_ref[...],
                                   jnp.max(x, axis=-1, keepdims=True))

        @pl.when(k == pl.num_programs(1) - 1)
        def _finalize():
            o_ref[...] = acc_ref[...]

    return kernel


def global_max_pool3d(x: jax.Array) -> jax.Array:
    """Max over the last three dims of x (keepdims), matching GlobalMaxPool3d."""
    assert x.ndim >= 3, "need at least 3 trailing dims to reduce"
    lead_shape = x.shape[:-3]
    d, h, w = x.shape[-3:]
    cols = d * h * w
    rows = 1
    for s in lead_shape:
        rows *= s
    rows = max(rows, 1)

    x2 = x.reshape(rows, cols)
    itemsize = jnp.dtype(x.dtype).itemsize
    sub = _sublane_multiple(x.dtype)
    tr, tc = _choose_tiles(rows, cols, itemsize, sub)

    row_tiles = pl.cdiv(rows, tr)
    col_tiles = pl.cdiv(cols, tc)
    mask_rows = (rows % tr) != 0
    mask_cols = (cols % tc) != 0
    fill = _min_value(x.dtype)

    kernel = _make_kernel(rows, cols, tr, tc, fill, mask_rows, mask_cols)

    out = pl.pallas_call(
        kernel,
        out_shape=jax.ShapeDtypeStruct((rows, 1), x.dtype),
        grid_spec=pltpu.PrefetchScalarGridSpec(
            num_scalar_prefetch=0,
            grid=(row_tiles, col_tiles),
            in_specs=[pl.BlockSpec((tr, tc), lambda i, k: (i, k))],
            out_specs=pl.BlockSpec((tr, 1), lambda i, k: (i, 0)),
            scratch_shapes=[pltpu.VMEM((tr, 1), x.dtype)],
        ),
        compiler_params=pltpu.CompilerParams(
            dimension_semantics=("parallel", "arbitrary"),
            # Above v5e's 16 MiB default, below v7x's 64 MiB physical VMEM.
            vmem_limit_bytes=48 * 1024 * 1024,
        ),
        cost_estimate=pl.CostEstimate(
            flops=0,
            transcendentals=0,
            bytes_accessed=rows * cols * itemsize + rows * itemsize,
        ),
    )(x2)

    return out.reshape(*lead_shape, 1, 1, 1)


if __name__ == "__main__":
    key = jax.random.PRNGKey(0)

    # Small NCDHW input: batch=2, channels=4, D=H=W=8 (aligned fast path).
    x = jax.random.normal(key, (2, 4, 8, 8, 8), dtype=jnp.float32)
    y = global_max_pool3d(x)
    jax.block_until_ready(y)
    y_ref = jnp.max(x, axis=(-1, -2, -3), keepdims=True)
    assert y.shape == (2, 4, 1, 1, 1), y.shape
    assert jnp.allclose(y, y_ref), "mismatch vs reference (aligned f32)"

    # Non-aligned rows / cols — exercises the in-kernel ragged-tile masking.
    x2 = jax.random.normal(jax.random.PRNGKey(1), (2, 3, 7, 6, 5),
                           dtype=jnp.float32)
    y2 = global_max_pool3d(x2)
    jax.block_until_ready(y2)
    y2_ref = jnp.max(x2, axis=(-1, -2, -3), keepdims=True)
    assert y2.shape == (2, 3, 1, 1, 1), y2.shape
    assert jnp.allclose(y2, y2_ref), "mismatch vs reference (ragged f32)"

    # bf16 — exercises the dtype-aware sublane tile (TR multiple of 16).
    x3 = jax.random.normal(jax.random.PRNGKey(2),
                           (2, 4, 8, 8, 8)).astype(jnp.bfloat16)
    y3 = global_max_pool3d(x3)
    jax.block_until_ready(y3)
    y3_ref = jnp.max(x3, axis=(-1, -2, -3), keepdims=True)
    assert jnp.all(y3 == y3_ref), "mismatch vs reference (bf16)"

    print("KERNEL_OK")
</pallas_src>

<mosaic_0001>
module attributes {stable_mosaic.version = 11 : i64} {
  func.func @kernel(%arg0: i32, %arg1: i32, %arg2: memref<8x512xf32, #tpu.memory_space<vmem>>, %arg3: memref<8x1xf32, #tpu.memory_space<vmem>>, %arg4: memref<8x1xf32, #tpu.memory_space<vmem>>) attributes {dimension_semantics = [#tpu.dimension_semantics<parallel>, #tpu.dimension_semantics<arbitrary>], iteration_bounds = array<i64: 1, 1>, scalar_prefetch = 0 : i64, scratch_operands = 1 : i64, tpu.core_type = #tpu.core_type<tc>, window_params = [{transform_indices = @transform_0, window_bounds = array<i64: 8, 512>}, {transform_indices = @transform_1, window_bounds = array<i64: 8, 1>}]} {
    %c0_i32 = arith.constant 0 : i32
    %0 = arith.cmpi eq, %arg1, %c0_i32 : i32
    %1 = arith.extui %0 : i1 to i32
    %c0_i32_0 = arith.constant 0 : i32
    %2 = arith.cmpi ne, %1, %c0_i32_0 : i32
    scf.if %2 {
      %cst_8 = arith.constant 0xFF800000 : f32
      %12 = vector.broadcast %cst_8 : f32 to vector<8x1xf32>
      %c0_9 = arith.constant 0 : index
      %c0_10 = arith.constant 0 : index
      %13 = vector.load %arg4[%c0_9, %c0_10] : memref<8x1xf32, #tpu.memory_space<vmem>>, vector<8x1xf32>
      tpu.vector_store %arg4[%c0_9, %c0_10], %12 {strides = array<i32>} : memref<8x1xf32, #tpu.memory_space<vmem>>, vector<8x1xf32>,
    } else {
    }
    %c0 = arith.constant 0 : index
    %c0_1 = arith.constant 0 : index
    %3 = vector.load %arg2[%c0, %c0_1] : memref<8x512xf32, #tpu.memory_space<vmem>>, vector<8x512xf32>
    %c0_2 = arith.constant 0 : index
    %c0_3 = arith.constant 0 : index
    %4 = vector.load %arg4[%c0_2, %c0_3] : memref<8x1xf32, #tpu.memory_space<vmem>>, vector<8x1xf32>
    %cst = arith.constant dense<0xFF800000> : vector<8xf32>
    %5 = vector.multi_reduction <maximumf>, %3, %cst [1] : vector<8x512xf32> to vector<8xf32>
    %6 = vector.shape_cast %5 : vector<8xf32> to vector<8x1xf32>
    %7 = arith.maximumf %4, %6 : vector<8x1xf32>
    %c0_4 = arith.constant 0 : index
    %c0_5 = arith.constant 0 : index
    %8 = vector.load %arg4[%c0_4, %c0_5] : memref<8x1xf32, #tpu.memory_space<vmem>>, vector<8x1xf32>
    tpu.vector_store %arg4[%c0_4, %c0_5], %7 {strides = array<i32>} : memref<8x1xf32, #tpu.memory_space<vmem>>, vector<8x1xf32>,
    %c0_i32_6 = arith.constant 0 : i32
    %9 = arith.cmpi eq, %arg1, %c0_i32_6 : i32
    %10 = arith.extui %9 : i1 to i32
    %c0_i32_7 = arith.constant 0 : i32
    %11 = arith.cmpi ne, %10, %c0_i32_7 : i32
    scf.if %11 {
      %c0_8 = arith.constant 0 : index
      %c0_9 = arith.constant 0 : index
      %12 = vector.load %arg4[%c0_8, %c0_9] : memref<8x1xf32, #tpu.memory_space<vmem>>, vector<8x1xf32>
      %c0_10 = arith.constant 0 : index
      %c0_11 = arith.constant 0 : index
      %13 = vector.load %arg3[%c0_10, %c0_11] : memref<8x1xf32, #tpu.memory_space<vmem>>, vector<8x1xf32>
      tpu.vector_store %arg3[%c0_10, %c0_11], %12 {strides = array<i32>} : memref<8x1xf32, #tpu.memory_space<vmem>>, vector<8x1xf32>,
    } else {
    }
    return
  }
  func.func @transform_0(%arg0: i32, %arg1: i32) -> (i32, i32) {
    %c0_i32 = arith.constant 0 : i32
    return %arg0, %arg1 : i32, i32
  }
  func.func @transform_1(%arg0: i32, %arg1: i32) -> (i32, i32) {
    %c0_i32 = arith.constant 0 : i32
    %c0_i32_0 = arith.constant 0 : i32
    return %arg0, %c0_i32 : i32, i32
  }
}

</mosaic_0001>

<llo_original>
// kernel: tpu_custom_call.1
$region0: #{tpu_custom_call.1}
  #allocation0 [shape = 'u32[]', space=smem, size = 0x4, offset = 0x4, fixed_abs, tag = 'smem constant byte address 0x4 - core index']
  #allocation1 [shape = 'u32[144,128]{1,0:T(1,128)}', space=vmem, size = 0x12000, scoped, tag = 'internal scratch']
  #allocation2 [shape = 'f32[8,1]{1,0:T(8,128)}', space=vmem, size = 0x1000, scoped, tag = 'scratch operand']
  %s0 = inlined_call_operand.hbm [shape: f32[8,512], index: 0, kind: input, shape index: {}]
  %s1 = inlined_call_operand.vmem [shape: f32[8,1], index: 1, kind: output, shape index: {}]
  %s2 = sld [smem:[#allocation0]]
  $region26: #{tpu_custom_call.1} parent=0
    _
  %s4 = ssub.s32 1, %s2
  %s5 = scalar_select 0, %s4, %s2
  $region1: #{tpu_custom_call.1} parent=0
    #allocation3 [shape = 'u8[16384]{0}', space=vmem, size = 0x4000, scoped, tag = 'input window, operand 0, single buffered']
    #allocation4 [shape = 's32[1]{0}', space=sflag, size = 0x4, scoped, tag = 'scoped memory for tpu_custom_call.1']
    %6 = vsyncpa [#allocation4], 0
    // Predicated region
    $region2: #{tpu_custom_call.1} parent=1 // pred_check
      _
    $region3: #{tpu_custom_call.1} parent=1 // pred_check_branch
      %8 = sbr.rel (0) target = $region5
    $region4: #{tpu_custom_call.1} parent=1 // pred_region
      %s10 = ssub.s32 512, 512
      %11 = vsyncadd [#allocation4], %s10
      %s13 = sshll.u32 [#allocation3], 4
      %s14 = int_to_ptr.vmem [resolvable:$true] %s13
      %16 = dma.hbm_to_vmem [thread:$0]  %s0, 512, %s14, [#allocation4]
    $region5: #{tpu_custom_call.1} parent=1 // pred_fallthru
      _
    // Predicated region
    $region6: #{tpu_custom_call.1} parent=1 // pred_check
      _
    $region7: #{tpu_custom_call.1} parent=1 // pred_check_branch
      %18 = sbr.rel (0) target = $region9
    $region8: #{tpu_custom_call.1} parent=1 // pred_region
      %19 = dma.done [#allocation4], 512
    $region9: #{tpu_custom_call.1} parent=1 // pred_fallthru
      _
    %p20 = scmp.eq.s32.totalorder 0, 0
    // Predicated region
    $region10: #{tpu_custom_call.1} parent=1 // pred_check
      %p21 = pneg %p20
    $region11: #{tpu_custom_call.1} parent=1 // pred_check_branch
      %23 = sbr.rel (%p21) target = $region13
    $region12: #{tpu_custom_call.1} parent=1 // pred_region
      %vm24 = vcmask 7168
      %25 = vst.msk [vmem:[#allocation2] sm:$0xff] %vm24, -inf
    $region13: #{tpu_custom_call.1} parent=1 // pred_fallthru
      _
    %v26 = vld [vmem:[#allocation3] sm:$0xff]
    %v27 = vld [vmem:[#allocation3 + $0x8] sm:$0xff]
    %v28 = vld [vmem:[#allocation3 + $0x10] sm:$0xff]
    %v29 = vld [vmem:[#allocation3 + $0x18] sm:$0xff]
    %v30 = vld [vmem:[#allocation2] sm:$0xff]
    %v31 = vmax.f32 %v26, %v27
    %v32 = vmax.f32 %v28, %v29
    %v33 = vmax.f32 %v31, %v32
    %34 = vmax.xlane.f32.xlu0 %v33
    %v35 = vpop.xlane.xlu0 %34
    %v36 = vmax.f32 %v30, %v35
    %vm37 = vcmask 7168
    %38 = vst.msk [vmem:[#allocation2] sm:$0xff] %vm37, %v36
    // Predicated region
    $region14: #{tpu_custom_call.1} parent=1 // pred_check
      %p39 = pneg %p20
    $region15: #{tpu_custom_call.1} parent=1 // pred_check_branch
      %41 = sbr.rel (%p39) target = $region17
    $region16: #{tpu_custom_call.1} parent=1 // pred_region
      %v42 = vld [vmem:[#allocation2] sm:$0xff]
      %43 = vst.msk [vmem:[%s1] sm:$0xff] %vm37, %v42
    $region17: #{tpu_custom_call.1} parent=1 // pred_fallthru
      _
    // Predicated region
    $region18: #{tpu_custom_call.1} parent=1 // pred_check
      _
    $region19: #{tpu_custom_call.1} parent=1 // pred_check_branch
      %45 = sbr.rel (0) target = $region21
    $region20: #{tpu_custom_call.1} parent=1 // pred_region
      _
    $region21: #{tpu_custom_call.1} parent=1 // pred_fallthru
      _
    // Predicated region
    $region22: #{tpu_custom_call.1} parent=1 // pred_check
      _
    $region23: #{tpu_custom_call.1} parent=1 // pred_check_branch
      %47 = sbr.rel (0) target = $region25
    $region24: #{tpu_custom_call.1} parent=1 // pred_region
      _
    $region25: #{tpu_custom_call.1} parent=1 // pred_fallthru
      _
    %48 = vsyncpa [#allocation4], 1

</llo_original>
